<compile_context>
chip_gen: v7x
topology: tpu7x:2x2x1
jax: 0.10.0
libtpu: 0.0.40
codegen_flags: <defaults>
</compile_context>

<pallas_src>
import functools

import jax
import jax.numpy as jnp
from jax.experimental import pallas as pl
from jax.experimental.pallas import tpu as pltpu

_LANES = 128


def _round_up(v, m):
    return (v + m - 1) // m * m


def _recall_stats_kernel(x_ref, tgt_ref, tp_ref, tt_ref, pp_ref,
                         acc_tp, acc_tt, acc_pp, *, tl, l_total, needs_mask):
    li = pl.program_id(1)

    @pl.when(li == 0)
    def _init():
        acc_tp[...] = jnp.zeros_like(acc_tp)
        acc_tt[...] = jnp.zeros_like(acc_tt)
        acc_pp[...] = jnp.zeros_like(acc_pp)

    # Upcast inside the kernel (matches `input.to(torch.float)`); bf16 inputs
    # therefore only move half the HBM bytes.
    x = x_ref[...].astype(jnp.float32)           # (1, C, TL)
    tgt = tgt_ref[...].astype(jnp.int32)         # (1, 1, TL), widened i8->i32
    _, c, _ = x.shape

    # Softmax over the class axis (dim=1); pt == exp(log_softmax(x)).
    m = jnp.max(x, axis=1, keepdims=True)        # sublane reduce
    e = jnp.exp(x - m)                           # EUP
    s = jnp.sum(e, axis=1, keepdims=True)
    pt = e * pl.reciprocal(s, approx=False)      # exact: keep 1e-5 numerics

    # Implicit one-hot: (1, C, 1) class iota broadcast against the targets;
    # no full-tile int32 iota is materialized.
    cls_idx = jax.lax.broadcasted_iota(jnp.int32, (1, c, 1), 1)
    hit = cls_idx == tgt                         # (1, C, TL) bool

    if needs_mask:
        # x is NOT padded in HBM, so the out-of-bounds lanes of the last tile
        # hold undefined data.  Gate both the one-hot and pt with a lane
        # validity mask; jnp.where is a select, so NaN/Inf produced by exp()
        # of garbage cannot leak into the sums.
        lane = jax.lax.broadcasted_iota(jnp.int32, (1, 1, tl), 2)
        valid = (li * tl + lane) < l_total       # (1, 1, TL)
        hit = jnp.logical_and(hit, valid)
        pt_for_pp = jnp.where(valid, pt, 0.0)
    else:
        pt_for_pp = pt

    # Per-step cross-lane reduction of each partial (VPU vreg adds + one XLU
    # reduce, both off the critical vst slot), accumulated into tiny (1,1,C)
    # scratch.  No full-tile accumulator load/store traffic.
    acc_tp[...] += jnp.sum(jnp.where(hit, pt, 0.0), axis=2)[:, None, :]
    acc_tt[...] += jnp.sum(hit.astype(jnp.float32), axis=2)[:, None, :]
    acc_pp[...] += jnp.sum(pt_for_pp, axis=2)[:, None, :]

    @pl.when(li == pl.num_programs(1) - 1)
    def _finalize():
        tp_ref[...] = acc_tp[...]    # true_positive  (1, 1, C)
        tt_ref[...] = acc_tt[...]    # total_target   (1, 1, C)
        pp_ref[...] = acc_pp[...]    # total_predict  (1, 1, C)


def _recall_stats(x_ncl, tgt_nl, *, max_tl=65536, vmem_limit_bytes=32 << 20):
    n, c, l = x_ncl.shape
    x_itemsize = jnp.dtype(x_ncl.dtype).itemsize

    # Narrow target on the wire when the class count fits in int8 (cheap VPU
    # widening in-kernel; saves HBM bytes, especially with bf16 logits).
    tgt_dtype = jnp.int8 if c <= 127 else jnp.int32
    tgt_itemsize = jnp.dtype(tgt_dtype).itemsize
    tgt_n1l = tgt_nl.astype(tgt_dtype).reshape(n, 1, l)

    # L-tile sizing against the true VMEM working set: sublane padding of C,
    # double buffering of the input blocks, and headroom for the compiler's
    # f32 full-tile temporaries (softmax intermediates) which are always f32
    # regardless of input dtype.
    sublane_mult = {1: 32, 2: 16, 4: 8}
    c_pad_x = _round_up(c, sublane_mult.get(x_itemsize, 8))
    c_pad_f32 = _round_up(c, 8)
    tgt_rows = sublane_mult.get(tgt_itemsize, 8)   # row pad of the (1, TL) block
    bytes_per_lane = (
        2 * c_pad_x * x_itemsize                   # double-buffered x block
        + 2 * tgt_rows * tgt_itemsize              # double-buffered target block
        + 4 * c_pad_f32 * 4)                       # f32 compute-temp headroom
    budget = (vmem_limit_bytes * 3) // 4           # slack for Mosaic scratch
    tl = max(_LANES, (budget // bytes_per_lane) // _LANES * _LANES)
    tl = min(tl, max(_LANES, max_tl // _LANES * _LANES))
    tl = min(tl, _round_up(l, _LANES))
    num_tiles = pl.cdiv(l, tl)                     # no HBM pad of x: ragged ok
    needs_mask = (l % tl) != 0

    kernel = functools.partial(_recall_stats_kernel, tl=tl, l_total=l,
                               needs_mask=needs_mask)
    out_sds = jax.ShapeDtypeStruct((n, 1, c), jnp.float32)

    grid_spec = pltpu.PrefetchScalarGridSpec(
        num_scalar_prefetch=0,
        grid=(n, num_tiles),
        in_specs=[
            pl.BlockSpec((1, c, tl), lambda ni, li: (ni, 0, li)),
            pl.BlockSpec((1, 1, tl), lambda ni, li: (ni, 0, li)),
        ],
        out_specs=(
            pl.BlockSpec((1, 1, c), lambda ni, li: (ni, 0, 0)),
            pl.BlockSpec((1, 1, c), lambda ni, li: (ni, 0, 0)),
            pl.BlockSpec((1, 1, c), lambda ni, li: (ni, 0, 0)),
        ),
        scratch_shapes=[
            pltpu.VMEM((1, 1, c), jnp.float32),
            pltpu.VMEM((1, 1, c), jnp.float32),
            pltpu.VMEM((1, 1, c), jnp.float32),
        ],
    )

    cost = pl.CostEstimate(
        flops=8 * n * c * l,
        transcendentals=n * c * l,
        bytes_accessed=n * c * l * x_itemsize + n * l * tgt_itemsize
        + 3 * n * c * 4,
    )

    # Batch axis is "parallel" (both TensorCores on v7x, no-op on v5e/v6e);
    # the L axis is the reduction axis with resident outputs -> "arbitrary",
    # and it is last in the grid.
    tp, tt, pp = pl.pallas_call(
        kernel,
        out_shape=(out_sds, out_sds, out_sds),
        grid_spec=grid_spec,
        compiler_params=pltpu.CompilerParams(
            dimension_semantics=("parallel", "arbitrary"),
            vmem_limit_bytes=vmem_limit_bytes,
        ),
        cost_estimate=cost,
    )(x_ncl, tgt_n1l)
    return tp.reshape(n, c), tt.reshape(n, c), pp.reshape(n, c)


class RecallLossPallas:
    """JAX/Pallas port of RecallLoss.forward (weight is required, mirroring
    the PyTorch code path where `hasattr(self, 'weight')` is True)."""

    def __init__(self, weight, max_tl=65536):
        weight = jnp.asarray(weight, dtype=jnp.float32)
        self.weight = weight / jnp.sum(weight)
        self.smooth = 1e-05
        self.max_tl = max_tl

    def __call__(self, inputs, target, AD_loss):
        n, c = inputs.shape[:2]
        # Keep logits in their native dtype on the wire (bf16 stays bf16);
        # the kernel upcasts to f32, matching `input.to(torch.float)`.
        x = inputs.reshape(n, c, -1)
        tgt = target.reshape(n, -1)

        true_positive, total_target, total_predict = _recall_stats(
            x, tgt, max_tl=self.max_tl)

        recall = (true_positive + self.smooth) / (total_target + self.smooth)
        precision = (true_positive + 1e-05) / (total_predict + 1e-05)
        f1 = 2.0 * recall * precision / (recall + precision)

        w = self.weight.astype(recall.dtype)
        recall_ori = recall * w * c
        precision_ori = precision * w * c
        f1 = f1 * w * c
        recall_w = (jnp.ones((n, c), recall.dtype) - recall) * w * c
        precision_w = (jnp.ones((n, c), precision.dtype) - precision) * w * c

        recall_loss = jnp.mean(recall_w)
        prec_loss = jnp.mean(precision_w)
        f1_loss = 1.0 - jnp.mean(f1)
        recall_ori_loss = 1.0 - jnp.mean(recall_ori)
        precision_ori_loss = 1.0 - jnp.mean(precision_ori)

        if AD_loss == "f1":
            return f1_loss
        elif AD_loss == "recall":
            return recall_loss
        elif AD_loss == "prec":
            return prec_loss
        elif AD_loss == "recall_ori":
            return recall_ori_loss
        elif AD_loss == "prec_ori":
            return precision_ori_loss


def _reference(inputs, target, weight, AD_loss, smooth=1e-05):
    # Pure-JAX reference of the PyTorch forward, for a correctness check.
    n, c = inputs.shape[:2]
    x = inputs.reshape(n, c, -1).astype(jnp.float32)
    tgt = target.reshape(n, -1).astype(jnp.int32)
    pt = jax.nn.softmax(x, axis=1)
    onehot = jax.nn.one_hot(tgt, c, axis=1, dtype=jnp.float32)
    tp = jnp.sum(pt * onehot, axis=2)
    tt = jnp.sum(onehot, axis=2)
    pp = jnp.sum(pt, axis=2)
    w = jnp.asarray(weight, jnp.float32)
    w = w / jnp.sum(w)
    recall = (tp + smooth) / (tt + smooth)
    precision = (tp + 1e-05) / (pp + 1e-05)
    f1 = 2 * recall * precision / (recall + precision) * w * c
    recall_ori = recall * w * c
    precision_ori = precision * w * c
    recall_w = (1.0 - recall) * w * c
    precision_w = (1.0 - precision) * w * c
    return {
        "f1": 1.0 - jnp.mean(f1),
        "recall": jnp.mean(recall_w),
        "prec": jnp.mean(precision_w),
        "recall_ori": 1.0 - jnp.mean(recall_ori),
        "prec_ori": 1.0 - jnp.mean(precision_ori),
    }[AD_loss]


if __name__ == "__main__":
    key = jax.random.PRNGKey(0)
    k_x1, k_t1, k_x2, k_t2 = jax.random.split(key, 4)
    ok = True

    # Case 1: L = 256 with a forced 128-lane tile -> 2-step reduction grid,
    # exercises the accumulate-across-L + init/finalize pattern.
    N, C, H, W = 2, 4, 16, 16
    x1 = jax.random.normal(k_x1, (N, C, H, W), dtype=jnp.float32)   # NCHW logits
    t1 = jax.random.randint(k_t1, (N, H, W), 0, C, dtype=jnp.int32)
    w1 = jnp.arange(1, C + 1, dtype=jnp.float32)
    loss_fn1 = RecallLossPallas(w1, max_tl=128)
    for ad_loss in ("f1", "recall", "prec", "recall_ori", "prec_ori"):
        out = jax.block_until_ready(loss_fn1(x1, t1, ad_loss))
        ref = _reference(x1, t1, w1, ad_loss)
        if not jnp.allclose(out, ref, atol=1e-5, rtol=1e-5):
            ok = False
            print(f"MISMATCH case1 {ad_loss}: kernel={out} ref={ref}")

    # Case 2: L = 100 (not lane aligned) -> exercises the in-kernel ragged
    # tail mask with NO wrapper-side padding of x or target.
    N2, C2, H2, W2 = 2, 5, 10, 10
    x2 = jax.random.normal(k_x2, (N2, C2, H2, W2), dtype=jnp.float32)
    t2 = jax.random.randint(k_t2, (N2, H2, W2), 0, C2, dtype=jnp.int32)
    w2 = jnp.arange(1, C2 + 1, dtype=jnp.float32)
    loss_fn2 = RecallLossPallas(w2)
    for ad_loss in ("f1", "recall", "prec", "recall_ori", "prec_ori"):
        out = jax.block_until_ready(loss_fn2(x2, t2, ad_loss))
        ref = _reference(x2, t2, w2, ad_loss)
        if not jnp.allclose(out, ref, atol=1e-5, rtol=1e-5):
            ok = False
            print(f"MISMATCH case2 {ad_loss}: kernel={out} ref={ref}")

    if ok:
        print("KERNEL_OK")
</pallas_src>

<mosaic_0001>
module attributes {stable_mosaic.version = 11 : i64} {
  func.func @_recall_stats_kernel(%arg0: i32, %arg1: i32, %arg2: memref<1x4x128xf32, #tpu.memory_space<vmem>>, %arg3: memref<1x1x128xi8, #tpu.memory_space<vmem>>, %arg4: memref<1x1x4xf32, #tpu.memory_space<vmem>>, %arg5: memref<1x1x4xf32, #tpu.memory_space<vmem>>, %arg6: memref<1x1x4xf32, #tpu.memory_space<vmem>>, %arg7: memref<1x1x4xf32, #tpu.memory_space<vmem>>, %arg8: memref<1x1x4xf32, #tpu.memory_space<vmem>>, %arg9: memref<1x1x4xf32, #tpu.memory_space<vmem>>) attributes {dimension_semantics = [#tpu.dimension_semantics<parallel>, #tpu.dimension_semantics<arbitrary>], iteration_bounds = array<i64: 2, 2>, scalar_prefetch = 0 : i64, scratch_operands = 3 : i64, tpu.core_type = #tpu.core_type<tc>, window_params = [{transform_indices = @transform_0, window_bounds = array<i64: 1, 4, 128>}, {transform_indices = @transform_1, window_bounds = array<i64: 1, 1, 128>}, {transform_indices = @transform_2, window_bounds = array<i64: 1, 1, 4>}, {transform_indices = @transform_3, window_bounds = array<i64: 1, 1, 4>}, {transform_indices = @transform_4, window_bounds = array<i64: 1, 1, 4>}]} {
    %c0_i32 = arith.constant 0 : i32
    %0 = arith.cmpi eq, %arg1, %c0_i32 : i32
    %1 = arith.extui %0 : i1 to i32
    %c0_i32_0 = arith.constant 0 : i32
    %2 = arith.cmpi ne, %1, %c0_i32_0 : i32
    scf.if %2 {
      %cst_30 = arith.constant 0.000000e+00 : f32
      %42 = vector.broadcast %cst_30 : f32 to vector<1x1x4xf32>
      %c0_31 = arith.constant 0 : index
      %c0_32 = arith.constant 0 : index
      %c0_33 = arith.constant 0 : index
      %43 = vector.load %arg7[%c0_31, %c0_32, %c0_33] : memref<1x1x4xf32, #tpu.memory_space<vmem>>, vector<1x1x4xf32>
      tpu.vector_store %arg7[%c0_31, %c0_32, %c0_33], %42 {strides = array<i32>} : memref<1x1x4xf32, #tpu.memory_space<vmem>>, vector<1x1x4xf32>,
      %cst_34 = arith.constant 0.000000e+00 : f32
      %44 = vector.broadcast %cst_34 : f32 to vector<1x1x4xf32>
      %c0_35 = arith.constant 0 : index
      %c0_36 = arith.constant 0 : index
      %c0_37 = arith.constant 0 : index
      %45 = vector.load %arg8[%c0_35, %c0_36, %c0_37] : memref<1x1x4xf32, #tpu.memory_space<vmem>>, vector<1x1x4xf32>
      tpu.vector_store %arg8[%c0_35, %c0_36, %c0_37], %44 {strides = array<i32>} : memref<1x1x4xf32, #tpu.memory_space<vmem>>, vector<1x1x4xf32>,
      %cst_38 = arith.constant 0.000000e+00 : f32
      %46 = vector.broadcast %cst_38 : f32 to vector<1x1x4xf32>
      %c0_39 = arith.constant 0 : index
      %c0_40 = arith.constant 0 : index
      %c0_41 = arith.constant 0 : index
      %47 = vector.load %arg9[%c0_39, %c0_40, %c0_41] : memref<1x1x4xf32, #tpu.memory_space<vmem>>, vector<1x1x4xf32>
      tpu.vector_store %arg9[%c0_39, %c0_40, %c0_41], %46 {strides = array<i32>} : memref<1x1x4xf32, #tpu.memory_space<vmem>>, vector<1x1x4xf32>,
    } else {
    }
    %c0 = arith.constant 0 : index
    %c0_1 = arith.constant 0 : index
    %c0_2 = arith.constant 0 : index
    %3 = vector.load %arg2[%c0, %c0_1, %c0_2] : memref<1x4x128xf32, #tpu.memory_space<vmem>>, vector<1x4x128xf32>
    %c0_3 = arith.constant 0 : index
    %c0_4 = arith.constant 0 : index
    %c0_5 = arith.constant 0 : index
    %4 = vector.load %arg3[%c0_3, %c0_4, %c0_5] : memref<1x1x128xi8, #tpu.memory_space<vmem>>, vector<1x1x128xi8>
    %5 = arith.extsi %4 : vector<1x1x128xi8> to vector<1x1x128xi32>
    %cst = arith.constant dense<0xFF800000> : vector<1x128xf32>
    %6 = vector.multi_reduction <maximumf>, %3, %cst [1] : vector<1x4x128xf32> to vector<1x128xf32>
    %7 = vector.shape_cast %6 : vector<1x128xf32> to vector<1x1x128xf32>
    %8 = vector.broadcast %7 : vector<1x1x128xf32> to vector<1x4x128xf32>
    %9 = arith.subf %3, %8 : vector<1x4x128xf32>
    %10 = math.exp %9 : vector<1x4x128xf32>
    %cst_6 = arith.constant dense<0.000000e+00> : vector<1x128xf32>
    %11 = vector.multi_reduction <add>, %10, %cst_6 [1] : vector<1x4x128xf32> to vector<1x128xf32>
    %12 = vector.shape_cast %11 : vector<1x128xf32> to vector<1x1x128xf32>
    %13 = tpu.reciprocal %12 : vector<1x1x128xf32> -> vector<1x1x128xf32>
    %14 = vector.broadcast %13 : vector<1x1x128xf32> to vector<1x4x128xf32>
    %15 = arith.mulf %10, %14 : vector<1x4x128xf32>
    %16 = tpu.iota {dimensions = array<i32: 1>} : vector<1x4x1xi32>
    %17 = vector.broadcast %16 : vector<1x4x1xi32> to vector<1x4x128xi32>
    %18 = vector.broadcast %5 : vector<1x1x128xi32> to vector<1x4x128xi32>
    %19 = arith.cmpi eq, %17, %18 : vector<1x4x128xi32>
    %c0_7 = arith.constant 0 : index
    %c0_8 = arith.constant 0 : index
    %c0_9 = arith.constant 0 : index
    %20 = vector.load %arg7[%c0_7, %c0_8, %c0_9] : memref<1x1x4xf32, #tpu.memory_space<vmem>>, vector<1x1x4xf32>
    %cst_10 = arith.constant 0.000000e+00 : f32
    %21 = vector.broadcast %cst_10 : f32 to vector<1x4x128xf32>
    %22 = arith.select %19, %15, %21 : vector<1x4x128xi1>, vector<1x4x128xf32>
    %cst_11 = arith.constant dense<0.000000e+00> : vector<1x4xf32>
    %23 = vector.multi_reduction <add>, %22, %cst_11 [2] : vector<1x4x128xf32> to vector<1x4xf32>
    %24 = vector.shape_cast %23 : vector<1x4xf32> to vector<1x1x4xf32>
    %25 = arith.addf %20, %24 : vector<1x1x4xf32>
    %c0_12 = arith.constant 0 : index
    %c0_13 = arith.constant 0 : index
    %c0_14 = arith.constant 0 : index
    %26 = vector.load %arg7[%c0_12, %c0_13, %c0_14] : memref<1x1x4xf32, #tpu.memory_space<vmem>>, vector<1x1x4xf32>
    tpu.vector_store %arg7[%c0_12, %c0_13, %c0_14], %25 {strides = array<i32>} : memref<1x1x4xf32, #tpu.memory_space<vmem>>, vector<1x1x4xf32>,
    %c0_15 = arith.constant 0 : index
    %c0_16 = arith.constant 0 : index
    %c0_17 = arith.constant 0 : index
    %27 = vector.load %arg8[%c0_15, %c0_16, %c0_17] : memref<1x1x4xf32, #tpu.memory_space<vmem>>, vector<1x1x4xf32>
    %28 = arith.extui %19 : vector<1x4x128xi1> to vector<1x4x128xi32>
    %29 = arith.sitofp %28 : vector<1x4x128xi32> to vector<1x4x128xf32>
    %cst_18 = arith.constant dense<0.000000e+00> : vector<1x4xf32>
    %30 = vector.multi_reduction <add>, %29, %cst_18 [2] : vector<1x4x128xf32> to vector<1x4xf32>
    %31 = vector.shape_cast %30 : vector<1x4xf32> to vector<1x1x4xf32>
    %32 = arith.addf %27, %31 : vector<1x1x4xf32>
    %c0_19 = arith.constant 0 : index
    %c0_20 = arith.constant 0 : index
    %c0_21 = arith.constant 0 : index
    %33 = vector.load %arg8[%c0_19, %c0_20, %c0_21] : memref<1x1x4xf32, #tpu.memory_space<vmem>>, vector<1x1x4xf32>
    tpu.vector_store %arg8[%c0_19, %c0_20, %c0_21], %32 {strides = array<i32>} : memref<1x1x4xf32, #tpu.memory_space<vmem>>, vector<1x1x4xf32>,
    %c0_22 = arith.constant 0 : index
    %c0_23 = arith.constant 0 : index
    %c0_24 = arith.constant 0 : index
    %34 = vector.load %arg9[%c0_22, %c0_23, %c0_24] : memref<1x1x4xf32, #tpu.memory_space<vmem>>, vector<1x1x4xf32>
    %cst_25 = arith.constant dense<0.000000e+00> : vector<1x4xf32>
    %35 = vector.multi_reduction <add>, %15, %cst_25 [2] : vector<1x4x128xf32> to vector<1x4xf32>
    %36 = vector.shape_cast %35 : vector<1x4xf32> to vector<1x1x4xf32>
    %37 = arith.addf %34, %36 : vector<1x1x4xf32>
    %c0_26 = arith.constant 0 : index
    %c0_27 = arith.constant 0 : index
    %c0_28 = arith.constant 0 : index
    %38 = vector.load %arg9[%c0_26, %c0_27, %c0_28] : memref<1x1x4xf32, #tpu.memory_space<vmem>>, vector<1x1x4xf32>
    tpu.vector_store %arg9[%c0_26, %c0_27, %c0_28], %37 {strides = array<i32>} : memref<1x1x4xf32, #tpu.memory_space<vmem>>, vector<1x1x4xf32>,
    %c1_i32 = arith.constant 1 : i32
    %39 = arith.cmpi eq, %arg1, %c1_i32 : i32
    %40 = arith.extui %39 : i1 to i32
    %c0_i32_29 = arith.constant 0 : i32
    %41 = arith.cmpi ne, %40, %c0_i32_29 : i32
    scf.if %41 {
      %c0_30 = arith.constant 0 : index
      %c0_31 = arith.constant 0 : index
      %c0_32 = arith.constant 0 : index
      %42 = vector.load %arg7[%c0_30, %c0_31, %c0_32] : memref<1x1x4xf32, #tpu.memory_space<vmem>>, vector<1x1x4xf32>
      %c0_33 = arith.constant 0 : index
      %c0_34 = arith.constant 0 : index
      %c0_35 = arith.constant 0 : index
      %43 = vector.load %arg4[%c0_33, %c0_34, %c0_35] : memref<1x1x4xf32, #tpu.memory_space<vmem>>, vector<1x1x4xf32>
      tpu.vector_store %arg4[%c0_33, %c0_34, %c0_35], %42 {strides = array<i32>} : memref<1x1x4xf32, #tpu.memory_space<vmem>>, vector<1x1x4xf32>,
      %c0_36 = arith.constant 0 : index
      %c0_37 = arith.constant 0 : index
      %c0_38 = arith.constant 0 : index
      %44 = vector.load %arg8[%c0_36, %c0_37, %c0_38] : memref<1x1x4xf32, #tpu.memory_space<vmem>>, vector<1x1x4xf32>
      %c0_39 = arith.constant 0 : index
      %c0_40 = arith.constant 0 : index
      %c0_41 = arith.constant 0 : index
      %45 = vector.load %arg5[%c0_39, %c0_40, %c0_41] : memref<1x1x4xf32, #tpu.memory_space<vmem>>, vector<1x1x4xf32>
      tpu.vector_store %arg5[%c0_39, %c0_40, %c0_41], %44 {strides = array<i32>} : memref<1x1x4xf32, #tpu.memory_space<vmem>>, vector<1x1x4xf32>,
      %c0_42 = arith.constant 0 : index
      %c0_43 = arith.constant 0 : index
      %c0_44 = arith.constant 0 : index
      %46 = vector.load %arg9[%c0_42, %c0_43, %c0_44] : memref<1x1x4xf32, #tpu.memory_space<vmem>>, vector<1x1x4xf32>
      %c0_45 = arith.constant 0 : index
      %c0_46 = arith.constant 0 : index
      %c0_47 = arith.constant 0 : index
      %47 = vector.load %arg6[%c0_45, %c0_46, %c0_47] : memref<1x1x4xf32, #tpu.memory_space<vmem>>, vector<1x1x4xf32>
      tpu.vector_store %arg6[%c0_45, %c0_46, %c0_47], %46 {strides = array<i32>} : memref<1x1x4xf32, #tpu.memory_space<vmem>>, vector<1x1x4xf32>,
    } else {
    }
    return
  }
  func.func @transform_0(%arg0: i32, %arg1: i32) -> (i32, i32, i32) {
    %c0_i32 = arith.constant 0 : i32
    %c0_i32_0 = arith.constant 0 : i32
    return %arg0, %c0_i32, %arg1 : i32, i32, i32
  }
  func.func @transform_1(%arg0: i32, %arg1: i32) -> (i32, i32, i32) {
    %c0_i32 = arith.constant 0 : i32
    %c0_i32_0 = arith.constant 0 : i32
    return %arg0, %c0_i32, %arg1 : i32, i32, i32
  }
  func.func @transform_2(%arg0: i32, %arg1: i32) -> (i32, i32, i32) {
    %c0_i32 = arith.constant 0 : i32
    %c0_i32_0 = arith.constant 0 : i32
    %c0_i32_1 = arith.constant 0 : i32
    return %arg0, %c0_i32, %c0_i32_0 : i32, i32, i32
  }
  func.func @transform_3(%arg0: i32, %arg1: i32) -> (i32, i32, i32) {
    %c0_i32 = arith.constant 0 : i32
    %c0_i32_0 = arith.constant 0 : i32
    %c0_i32_1 = arith.constant 0 : i32
    return %arg0, %c0_i32, %c0_i32_0 : i32, i32, i32
  }
  func.func @transform_4(%arg0: i32, %arg1: i32) -> (i32, i32, i32) {
    %c0_i32 = arith.constant 0 : i32
    %c0_i32_0 = arith.constant 0 : i32
    %c0_i32_1 = arith.constant 0 : i32
    return %arg0, %c0_i32, %c0_i32_0 : i32, i32, i32
  }
}

</mosaic_0001>

<llo_original>
// kernel: tpu_custom_call.1
$region0: #{tpu_custom_call.1}
  #allocation0 [shape = 'u32[]', space=smem, size = 0x4, offset = 0x4, fixed_abs, tag = 'smem constant byte address 0x4 - core index']
  #allocation1 [shape = 'u32[144,128]{1,0:T(1,128)}', space=vmem, size = 0x12000, scoped, tag = 'internal scratch']
  #allocation2 [shape = 'f32[1,1,4]{2,1,0:T(1,128)}', space=vmem, size = 0x200, scoped, tag = 'scratch operand']
  #allocation3 [shape = 'f32[1,1,4]{2,1,0:T(1,128)}', space=vmem, size = 0x200, scoped, tag = 'scratch operand']
  #allocation4 [shape = 'f32[1,1,4]{2,1,0:T(1,128)}', space=vmem, size = 0x200, scoped, tag = 'scratch operand']
  %s0 = inlined_call_operand.hbm [shape: f32[2,4,256], index: 0, kind: input, shape index: {}]
  %s1 = inlined_call_operand.vmem [shape: s8[2,1,256], index: 1, kind: input, shape index: {}]
  %s2 = inlined_call_operand.hbm [shape: f32[2,1,4], index: 2, kind: output, shape index: {0}]
  %s3 = inlined_call_operand.hbm [shape: f32[2,1,4], index: 3, kind: output, shape index: {1}]
  %s4 = inlined_call_operand.hbm [shape: f32[2,1,4], index: 4, kind: output, shape index: {2}]
  %5 = xla_tuple %s2, %s3, %s4
  %s6 = sld [smem:[#allocation0]]
  $region69: #{tpu_custom_call.1} parent=0
    _
  %s8 = ssub.s32 1, %s6
  %s9 = scalar_select 0, %s8, %s6
  $region1: #{tpu_custom_call.1} parent=0
    #allocation5 [shape = 'u8[4096]{0}', space=vmem, size = 0x1000, scoped, tag = 'input window, operand 0']
    #allocation6 [shape = 's32[2]{0}', space=sflag, size = 0x8, scoped, tag = 'scoped memory for tpu_custom_call.1']
    #allocation7 [shape = 's32[2]{0}', space=sflag, size = 0x8, scoped, tag = 'scoped memory for tpu_custom_call.1']
    #allocation8 [shape = 'u8[1024]{0}', space=vmem, size = 0x400, scoped, tag = 'output window, operand 0']
    #allocation9 [shape = 'u8[1024]{0}', space=vmem, size = 0x400, scoped, tag = 'output window, operand 1']
    #allocation10 [shape = 's32[2]{0}', space=sflag, size = 0x8, scoped, tag = 'scoped memory for tpu_custom_call.1']
    #allocation11 [shape = 'u8[1024]{0}', space=vmem, size = 0x400, scoped, tag = 'output window, operand 2']
    %10 = vsyncpa [#allocation6], 0
    %s11 = scalar_lea.sflag [#allocation6], 1
    %12 = vsyncpa %s11, 0
    %13 = vsyncpa [#allocation7], 0
    %s14 = scalar_lea.sflag [#allocation7], 1
    %15 = vsyncpa %s14, 0
    %16 = vsyncpa [#allocation10], 0
    %s17 = scalar_lea.sflag [#allocation10], 1
    %18 = vsyncpa %s17, 0
    loop: start=0, step=1, limit=6
    $region2: #{tpu_custom_call.1} parent=1 // loop_pre_header
      _
    $region3: #{tpu_custom_call.1} parent=1 // loop_header
      %s20 = sphi 0, %s24
      %p21 = scmp.ge.s32.totalorder %s20, 6
      %s27 = sphi 0, %s39
      %s28 = sphi 0, %s35
      %s29 = sphi 0, %s27
      %s30 = sphi 0, %s28
      %s31 = sphi 0, %s29
      %s32 = sphi 0, %s30
      %s44 = sphi 0, %s46
      %s47 = sphi 0, %s44
      %s48 = sphi 0, %s47
      %s64 = sphi 0, %s48
      %s72 = sphi 0, %s74
      %s75 = sphi 0, %s72
      %s76 = sphi 0, %s75
      %s92 = sphi 0, %s76
      %s98 = sphi 0, %s100
      %s101 = sphi 0, %s98
      %s102 = sphi 0, %s101
      %s118 = sphi 0, %s102
      %s124 = sphi 0, %s126
      %s127 = sphi 0, %s124
      %s128 = sphi 0, %s127
      %s144 = sphi 0, %s128
      %s150 = sphi 0, %s152
      %s153 = sphi 0, %s150
      %s154 = sphi 0, %s153
      %s170 = sphi 0, %s154
    $region4: #{tpu_custom_call.1} parent=1 // loop_header_branch
      %23 = sbr.rel (%p21) target = $region8
    $region5: #{tpu_custom_call.1} parent=1 // loop_body
      %s25 = ssub.s32 %s20, 1
      %s26 = ssub.s32 %s20, 2
      %s33 = sadd.s32 1, %s28
      %p34 = scmp.ge.s32.totalorder %s33, 2
      %s35 = scalar_select %p34, 0, %s33
      %s36 = sadd.s32 1, %s27
      %s37 = scalar_select %p34, %s36, %s27
      %p38 = scmp.ge.s32.totalorder %s37, 2
      %s39 = scalar_select %p38, 0, %s37
      %s40 = ssub.s32 %s27, %s39
      %s41 = ssub.s32 %s28, %s35
      %s42 = sor.u32 %s40, %s41
      %p43 = scmp.eq.s32.totalorder %s42, 0
      %s45 = sadd.s32 %s44, 1
      %s46 = scalar_select %p43, %s44, %s45
      %p49 = pneg %p43
      %p50 = scmp.eq.s32.totalorder %s20, 3
      %p51 = por %p49, %p50
      %p52 = scmp.ne.s32.totalorder %s44, %s47
      %p53 = scmp.eq.s32.totalorder %s20, 0
      %p54 = por %p52, %p53
      %p55 = scmp.ne.s32.totalorder %s44, %s47
      %p56 = scmp.eq.s32.totalorder %s25, 3
      %p57 = por %p55, %p56
      %p58 = scmp.ne.s32.totalorder %s47, %s48
      %p59 = scmp.eq.s32.totalorder %s25, 0
      %p60 = por %p58, %p59
      %p61 = scmp.ne.s32.totalorder %s47, %s48
      %p62 = scmp.eq.s32.totalorder %s26, 3
      %p63 = por %p61, %p62
      %p65 = scmp.ne.s32.totalorder %s48, %s64
      %p66 = scmp.eq.s32.totalorder %s26, 0
      %p67 = por %p65, %p66
      %s68 = ssub.s32 %s27, %s39
      %s69 = ssub.s32 %s28, %s35
      %s70 = sor.u32 %s68, %s69
      %p71 = scmp.eq.s32.totalorder %s70, 0
      %s73 = sadd.s32 %s72, 1
      %s74 = scalar_select %p71, %s72, %s73
      %p77 = pneg %p71
      %p78 = scmp.eq.s32.totalorder %s20, 3
      %p79 = por %p77, %p78
      %p80 = scmp.ne.s32.totalorder %s72, %s75
      %p81 = scmp.eq.s32.totalorder %s20, 0
      %p82 = por %p80, %p81
      %p83 = scmp.ne.s32.totalorder %s72, %s75
      %p84 = scmp.eq.s32.totalorder %s25, 3
      %p85 = por %p83, %p84
      %p86 = scmp.ne.s32.totalorder %s75, %s76
      %p87 = scmp.eq.s32.totalorder %s25, 0
      %p88 = por %p86, %p87
      %p89 = scmp.ne.s32.totalorder %s75, %s76
      %p90 = scmp.eq.s32.totalorder %s26, 3
      %p91 = por %p89, %p90
      %p93 = scmp.ne.s32.totalorder %s76, %s92
      %p94 = scmp.eq.s32.totalorder %s26, 0
      %p95 = por %p93, %p94
      %s96 = ssub.s32 %s27, %s39
      %p97 = scmp.eq.s32.totalorder %s96, 0
      %s99 = sadd.s32 %s98, 1
      %s100 = scalar_select %p97, %s98, %s99
      %p103 = pneg %p97
      %p104 = scmp.eq.s32.totalorder %s20, 3
      %p105 = por %p103, %p104
      %p106 = scmp.ne.s32.totalorder %s98, %s101
      %p107 = scmp.eq.s32.totalorder %s20, 0
      %p108 = por %p106, %p107
      %p109 = scmp.ne.s32.totalorder %s98, %s101
      %p110 = scmp.eq.s32.totalorder %s25, 3
      %p111 = por %p109, %p110
      %p112 = scmp.ne.s32.totalorder %s101, %s102
      %p113 = scmp.eq.s32.totalorder %s25, 0
      %p114 = por %p112, %p113
      %p115 = scmp.ne.s32.totalorder %s101, %s102
      %p116 = scmp.eq.s32.totalorder %s26, 3
      %p117 = por %p115, %p116
      %p119 = scmp.ne.s32.totalorder %s102, %s118
      %p120 = scmp.eq.s32.totalorder %s26, 0
      %p121 = por %p119, %p120
      %s122 = ssub.s32 %s27, %s39
      %p123 = scmp.eq.s32.totalorder %s122, 0
      %s125 = sadd.s32 %s124, 1
      %s126 = scalar_select %p123, %s124, %s125
      %p129 = pneg %p123
      %p130 = scmp.eq.s32.totalorder %s20, 3
      %p131 = por %p129, %p130
      %p132 = scmp.ne.s32.totalorder %s124, %s127
      %p133 = scmp.eq.s32.totalorder %s20, 0
      %p134 = por %p132, %p133
      %p135 = scmp.ne.s32.totalorder %s124, %s127
      %p136 = scmp.eq.s32.totalorder %s25, 3
      %p137 = por %p135, %p136
      %p138 = scmp.ne.s32.totalorder %s127, %s128
      %p139 = scmp.eq.s32.totalorder %s25, 0
      %p140 = por %p138, %p139
      %p141 = scmp.ne.s32.totalorder %s127, %s128
      %p142 = scmp.eq.s32.totalorder %s26, 3
      %p143 = por %p141, %p142
      %p145 = scmp.ne.s32.totalorder %s128, %s144
      %p146 = scmp.eq.s32.totalorder %s26, 0
      %p147 = por %p145, %p146
      %s148 = ssub.s32 %s27, %s39
      %p149 = scmp.eq.s32.totalorder %s148, 0
      %s151 = sadd.s32 %s150, 1
      %s152 = scalar_select %p149, %s150, %s151
      %p155 = pneg %p149
      %p156 = scmp.eq.s32.totalorder %s20, 3
      %p157 = por %p155, %p156
      %p158 = scmp.ne.s32.totalorder %s150, %s153
      %p159 = scmp.eq.s32.totalorder %s20, 0
      %p160 = por %p158, %p159
      %p161 = scmp.ne.s32.totalorder %s150, %s153
      %p162 = scmp.eq.s32.totalorder %s25, 3
      %p163 = por %p161, %p162
      %p164 = scmp.ne.s32.totalorder %s153, %s154
      %p165 = scmp.eq.s32.totalorder %s25, 0
      %p166 = por %p164, %p165
      %p167 = scmp.ne.s32.totalorder %s153, %s154
      %p168 = scmp.eq.s32.totalorder %s26, 3
      %p169 = por %p167, %p168
      %p171 = scmp.ne.s32.totalorder %s154, %s170
      %p172 = scmp.eq.s32.totalorder %s26, 0
      %p173 = por %p171, %p172
      %p174 = scmp.le.s32.totalorder 1, %s20
      %p175 = scmp.lt.s32.totalorder %s20, 5
      %p176 = pnand %p174, %p175
      %p177 = pneg %p176
      // Predicated region
      $region9: #{tpu_custom_call.1} parent=5 // pred_check
        _
      $region10: #{tpu_custom_call.1} parent=5 // pred_check_branch
        %179 = sbr.rel (%p176) target = $region12
      $region11: #{tpu_custom_call.1} parent=5 // pred_region
        %s180 = ssub.s32 %s20, 1
      $region12: #{tpu_custom_call.1} parent=5 // pred_fallthru
        _
      %p181 = scmp.lt.s32.totalorder %s20, 4
      // Predicated region
      $region13: #{tpu_custom_call.1} parent=5 // pred_check
        %p182 = pneg %p181
      $region14: #{tpu_custom_call.1} parent=5 // pred_check_branch
        %184 = sbr.rel (%p182) target = $region16
      $region15: #{tpu_custom_call.1} parent=5 // pred_region
        // Predicated region
        $region17: #{tpu_custom_call.1} parent=15 // pred_check
          %p185 = pneg %p54
        $region18: #{tpu_custom_call.1} parent=15 // pred_check_branch
          %187 = sbr.rel (%p185) target = $region20
        $region19: #{tpu_custom_call.1} parent=15 // pred_region
          %s188 = sand.u32 %s44, 1
          %s189 = scalar_lea.sflag [#allocation6], %s188
          %s190 = sand.u32 %s44, 1
          %s191 = smul.addr %s190, 4
          %s192 = scalar_lea.vmem [#allocation5], %s191
          %s194 = ssub.s32 64, 64
          %195 = vsyncadd %s189, %s194
          %s196 = smul.addr %s27, 2
          %s197 = sadd.s32 %s28, %s196
          %s198 = smul.addr %s197, 64
          %s199 = scalar_lea.hbm %s0, %s198
          %s201 = sshll.u32 %s192, 4
          %s202 = int_to_ptr.vmem [resolvable:$true] %s201
          %204 = dma.hbm_to_vmem [thread:$0]  %s199, 64, %s202, %s189
        $region20: #{tpu_custom_call.1} parent=15 // pred_fallthru
          _
        // Predicated region
        $region21: #{tpu_custom_call.1} parent=15 // pred_check
          %p205 = pneg %p82
        $region22: #{tpu_custom_call.1} parent=15 // pred_check_branch
          %207 = sbr.rel (%p205) target = $region24
        $region23: #{tpu_custom_call.1} parent=15 // pred_region
          %p208 = scmp.lt.s32.totalorder %s27, 1
          %s209 = scalar_select %p208, %s27, 1
          %p210 = scmp.lt.s32.totalorder %s28, 1
          %s211 = scalar_select %p210, %s28, 1
          %s212 = smul.addr %s209, 2
          %s213 = sadd.s32 %s211, %s212
          %s214 = scalar_lea.vmem %s1, %s213
        $region24: #{tpu_custom_call.1} parent=15 // pred_fallthru
          _
      $region16: #{tpu_custom_call.1} parent=5 // pred_fallthru
        _
      %p215 = scmp.le.s32.totalorder 1, %s20
      %p216 = scmp.lt.s32.totalorder %s20, 5
      %p217 = pnand %p215, %p216
      %p218 = pneg %p217
      // Predicated region
      $region25: #{tpu_custom_call.1} parent=5 // pred_check
        _
      $region26: #{tpu_custom_call.1} parent=5 // pred_check_branch
        %220 = sbr.rel (%p217) target = $region28
      $region27: #{tpu_custom_call.1} parent=5 // pred_region
        %s221 = ssub.s32 %s20, 1
        %s222 = sand.u32 %s47, 1
        %s223 = scalar_lea.sflag [#allocation6], %s222
        %s224 = sand.u32 %s47, 1
        %s225 = smul.addr %s224, 4
        %s226 = scalar_lea.vmem [#allocation5], %s225
        // Predicated region
        $region29: #{tpu_custom_call.1} parent=27 // pred_check
          %p227 = pneg %p60
        $region30: #{tpu_custom_call.1} parent=27 // pred_check_branch
          %229 = sbr.rel (%p227) target = $region32
        $region31: #{tpu_custom_call.1} parent=27 // pred_region
          %230 = dma.done %s223, 64
        $region32: #{tpu_custom_call.1} parent=27 // pred_fallthru
          _
        %s231 = sand.u32 %s47, 1
        %s232 = scalar_lea.sflag [#allocation6], %s231
        %s233 = sand.u32 %s47, 1
        %s234 = smul.addr %s233, 4
        %s235 = scalar_lea.vmem [#allocation5], %s234
        %p236 = pneg %p60
        %p237 = pneg %p57
        %p238 = scmp.lt.s32.totalorder %s29, 1
        %s239 = scalar_select %p238, %s29, 1
        %p240 = scmp.lt.s32.totalorder %s30, 1
        %s241 = scalar_select %p240, %s30, 1
        %s242 = smul.addr %s239, 2
        %s243 = sadd.s32 %s241, %s242
        %s244 = scalar_lea.vmem %s1, %s243
        %p245 = pneg %p88
        %p246 = pneg %p85
        %p247 = pneg %p114
        %p248 = pneg %p111
        %s249 = sand.u32 %s101, 1
        %s250 = scalar_lea.sflag [#allocation7], %s249
        %s251 = sand.u32 %s101, 1
        %s252 = scalar_lea.vmem [#allocation8], %s251
        %p253 = pneg %p140
        %p254 = pneg %p137
        %s255 = sand.u32 %s25, 1
        %s256 = scalar_lea.sflag [#allocation10], %s255
        %s257 = sand.u32 %s127, 1
        %s258 = scalar_lea.vmem [#allocation9], %s257
        %p259 = pneg %p166
        %p260 = pneg %p163
        %s261 = sand.u32 %s25, 1
        %s262 = scalar_lea.sflag [#allocation10], %s261
        %s263 = sand.u32 %s153, 1
        %s264 = scalar_lea.vmem [#allocation11], %s263
        %p265 = scmp.lt.s32.totalorder %s29, 1
        %s266 = scalar_select %p265, %s29, 1
        %p267 = scmp.lt.s32.totalorder %s30, 1
        %s268 = scalar_select %p267, %s30, 1
        %s269 = smul.addr %s266, 2
        %s270 = sadd.s32 %s268, %s269
        %s271 = scalar_lea.vmem %s1, %s270
        %p272 = scmp.eq.s32.totalorder %s30, 0
        // Predicated region
        $region33: #{tpu_custom_call.1} parent=27 // pred_check
          %p273 = pneg %p272
        $region34: #{tpu_custom_call.1} parent=27 // pred_check_branch
          %275 = sbr.rel (%p273) target = $region36
        $region35: #{tpu_custom_call.1} parent=27 // pred_region
          %vm276 = vcmask 24576
          %277 = vst.msk [vmem:[#allocation2] sm:$0x1] %vm276, 0.0
          %278 = vst.msk [vmem:[#allocation3] sm:$0x1] %vm276, 0.0
          %279 = vst.msk [vmem:[#allocation4] sm:$0x1] %vm276, 0.0
        $region36: #{tpu_custom_call.1} parent=27 // pred_fallthru
          _
        %v280 = vld [vmem:[%s226] sm:$0xf]
        %v281 = vld [vmem:[%s271] sm:$0x1]
        %v282 = vunpack.c.0.s8 %v281
        %vm283 = vcmask 1043456
        %v284 = vsel %vm283, %v280, -inf
        %v285 = vrot.slane %v284, 4
        %v286 = vmax.f32 %v284, %v285
        %v287 = vrot.slane %v286, 2
        %v288 = vmax.f32 %v286, %v287
        %v289 = vrot.slane %v288, 1
        %v290 = vmax.f32 %v288, %v289
        %v291 = vsub.f32 %v280, %v290
        %v292 = vmul.f32 %v291, 1.442695
        %v293 = vpow.pop %v292
        %v294 = vsel %vm283, %v293, 0.0
        %v295 = vrot.slane %v294, 4
        %v296 = vadd.f32 %v294, %v295
        %v297 = vrot.slane %v296, 2
        %v298 = vadd.f32 %v296, %v297
        %v299 = vrot.slane %v298, 1
        %v300 = vadd.f32 %v298, %v299
        %v301 = vrcp.pop %v300
        %v302 = vmul.f32 %v293, %v301
        %v303 = vlaneseq
        %v304 = vshrl.u32 %v303, 7
        %v305 = vlaneseq
        %v306 = vshrl.u32 %v305, 7
        %v307 = vsub.s32 0, %v306
        %v308 = vrot.slane %v282, %v307
        %vm309 = vcmp.eq.s32.totalorder %v304, %v308
        %v310 = vld [vmem:[#allocation2] sm:$0x1]
        %v311 = vsel %vm309, %v302, 0.0
        %v312 = vsel %vm283, %v311, 0.0
        %313 = vadd.xlane.f32.xlu0 %v312
        %v314 = vpop.xlane.xlu0 %313
        %v316 = vlaneseq
        %v317 = vshrl.u32 %v316, 7
        %v318 = vsub.s32 0, %v317
        %v319 = vrot.slane %v314, %v318
        %v320 = vlaneseq
        %v321 = vshrl.u32 %v320, 7
        %v322 = vsub.s32 1, %v321
        %v323 = vrot.slane %v314, %v322
        %v324 = vlaneseq
        %v325 = vshrl.u32 %v324, 7
        %v326 = vsub.s32 2, %v325
        %v327 = vrot.slane %v314, %v326
        %v328 = vlaneseq
        %v329 = vshrl.u32 %v328, 7
        %v330 = vsub.s32 3, %v329
        %v331 = vrot.slane %v314, %v330
        %v332 = vcombine.low %v319, %v323
        %v333 = vcombine.low %v327, %v331
        %v335 = vunpack.c.l.s4 1966171168
        %v336 = vunpack.c.0.s8 %v335
        %v337 = vlaneseq
        %v338 = vshrl.u32 %v337, 7
        %v339 = vsub.s32 %v336, %v338
        %v340 = vrot.slane %v332, %v339
        %v342 = vunpack.c.l.s4 1966171168
        %v343 = vunpack.c.0.s8 %v342
        %v344 = vlaneseq
        %v345 = vshrl.u32 %v344, 7
        %v346 = vsub.s32 %v343, %v345
        %v347 = vrot.slane %v333, %v346
        %v348 = vcombine.low %v340, %v347
        %v350 = vunpack.c.l.s4 1966171168
        %v351 = vunpack.c.0.s8 %v350
        %v352 = vlaneseq
        %v353 = vshrl.u32 %v352, 7
        %v354 = vsub.s32 %v351, %v353
        %v355 = vrot.slane %v348, %v354
        %356 = vset.pattern.permute.xlu0 0
        %357 = vperm.xlu0 %356, %v355
        %v358 = vpop.permute.xlu0 %357
        %v359 = vlaneseq
        %v360 = vand.u32 %v359, 127
        %v361 = vlaneseq
        %v362 = vshrl.u32 %v361, 7
        %v363 = vsub.s32 %v360, %v362
        %v364 = vrot.slane %v358, %v363
        %v366 = vunpack.c.l.s4 1966171168
        %v367 = vunpack.c.0.s8 %v366
        %v368 = vlaneseq
        %v369 = vshrl.u32 %v368, 7
        %v370 = vsub.s32 %v367, %v369
        %v371 = vrot.slane %v364, %v370
        %v373 = vunpack.c.l.s4 1966171168
        %v374 = vunpack.c.0.s8 %v373
        %v375 = vlaneseq
        %v376 = vshrl.u32 %v375, 7
        %v377 = vsub.s32 %v374, %v376
        %v378 = vrot.slane %v371, %v377
        %v380 = vadd.f32 %v310, %v378
        %vm381 = vcmask 24576
        %382 = vst.msk [vmem:[#allocation2] sm:$0x1] %vm381, %v380
        %v383 = vld [vmem:[#allocation3] sm:$0x1]
        %v384 = vsel %vm309, 1, 0
        %v385 = vcvt.s32.f32 %v384
        %v386 = vsel %vm283, %v385, 0.0
        %387 = vadd.xlane.f32.xlu0 %v386
        %v388 = vpop.xlane.xlu0 %387
        %v390 = vlaneseq
        %v391 = vshrl.u32 %v390, 7
        %v392 = vsub.s32 0, %v391
        %v393 = vrot.slane %v388, %v392
        %v394 = vlaneseq
        %v395 = vshrl.u32 %v394, 7
        %v396 = vsub.s32 1, %v395
        %v397 = vrot.slane %v388, %v396
        %v398 = vlaneseq
        %v399 = vshrl.u32 %v398, 7
        %v400 = vsub.s32 2, %v399
        %v401 = vrot.slane %v388, %v400
        %v402 = vlaneseq
        %v403 = vshrl.u32 %v402, 7
        %v404 = vsub.s32 3, %v403
        %v405 = vrot.slane %v388, %v404
        %v406 = vcombine.low %v393, %v397
        %v407 = vcombine.low %v401, %v405
        %v409 = vunpack.c.l.s4 1966171168
        %v410 = vunpack.c.0.s8 %v409
        %v411 = vlaneseq
        %v412 = vshrl.u32 %v411, 7
        %v413 = vsub.s32 %v410, %v412
        %v414 = vrot.slane %v406, %v413
        %v416 = vunpack.c.l.s4 1966171168
        %v417 = vunpack.c.0.s8 %v416
        %v418 = vlaneseq
        %v419 = vshrl.u32 %v418, 7
        %v420 = vsub.s32 %v417, %v419
        %v421 = vrot.slane %v407, %v420
        %v422 = vcombine.low %v414, %v421
        %v424 = vunpack.c.l.s4 1966171168
        %v425 = vunpack.c.0.s8 %v424
        %v426 = vlaneseq
        %v427 = vshrl.u32 %v426, 7
        %v428 = vsub.s32 %v425, %v427
        %v429 = vrot.slane %v422, %v428
        %430 = vset.pattern.permute.xlu0 0
        %431 = vperm.xlu0 %430, %v429
        %v432 = vpop.permute.xlu0 %431
        %v433 = vlaneseq
        %v434 = vshrl.u32 %v433, 7
        %v435 = vsub.s32 %v360, %v434
        %v436 = vrot.slane %v432, %v435
        %v438 = vunpack.c.l.s4 1966171168
        %v439 = vunpack.c.0.s8 %v438
        %v440 = vlaneseq
        %v441 = vshrl.u32 %v440, 7
        %v442 = vsub.s32 %v439, %v441
        %v443 = vrot.slane %v436, %v442
        %v445 = vunpack.c.l.s4 1966171168
        %v446 = vunpack.c.0.s8 %v445
        %v447 = vlaneseq
        %v448 = vshrl.u32 %v447, 7
        %v449 = vsub.s32 %v446, %v448
        %v450 = vrot.slane %v443, %v449
        %v452 = vadd.f32 %v383, %v450
        %453 = vst.msk [vmem:[#allocation3] sm:$0x1] %vm381, %v452
        %v454 = vld [vmem:[#allocation4] sm:$0x1]
        %v455 = vsel %vm283, %v302, 0.0
        %456 = vadd.xlane.f32.xlu0 %v455
        %v457 = vpop.xlane.xlu0 %456
        %v459 = vlaneseq
        %v460 = vshrl.u32 %v459, 7
        %v461 = vsub.s32 0, %v460
        %v462 = vrot.slane %v457, %v461
        %v463 = vlaneseq
        %v464 = vshrl.u32 %v463, 7
        %v465 = vsub.s32 1, %v464
        %v466 = vrot.slane %v457, %v465
        %v467 = vlaneseq
        %v468 = vshrl.u32 %v467, 7
        %v469 = vsub.s32 2, %v468
        %v470 = vrot.slane %v457, %v469
        %v471 = vlaneseq
        %v472 = vshrl.u32 %v471, 7
        %v473 = vsub.s32 3, %v472
        %v474 = vrot.slane %v457, %v473
        %v475 = vcombine.low %v462, %v466
        %v476 = vcombine.low %v470, %v474
        %v478 = vunpack.c.l.s4 1966171168
        %v479 = vunpack.c.0.s8 %v478
        %v480 = vlaneseq
        %v481 = vshrl.u32 %v480, 7
        %v482 = vsub.s32 %v479, %v481
        %v483 = vrot.slane %v475, %v482
        %v485 = vunpack.c.l.s4 1966171168
        %v486 = vunpack.c.0.s8 %v485
        %v487 = vlaneseq
        %v488 = vshrl.u32 %v487, 7
        %v489 = vsub.s32 %v486, %v488
        %v490 = vrot.slane %v476, %v489
        %v491 = vcombine.low %v483, %v490
        %v493 = vunpack.c.l.s4 1966171168
        %v494 = vunpack.c.0.s8 %v493
        %v495 = vlaneseq
        %v496 = vshrl.u32 %v495, 7
        %v497 = vsub.s32 %v494, %v496
        %v498 = vrot.slane %v491, %v497
        %499 = vset.pattern.permute.xlu0 0
        %500 = vperm.xlu0 %499, %v498
        %v501 = vpop.permute.xlu0 %500
        %v502 = vlaneseq
        %v503 = vshrl.u32 %v502, 7
        %v504 = vsub.s32 %v360, %v503
        %v505 = vrot.slane %v501, %v504
        %v507 = vunpack.c.l.s4 1966171168
        %v508 = vunpack.c.0.s8 %v507
        %v509 = vlaneseq
        %v510 = vshrl.u32 %v509, 7
        %v511 = vsub.s32 %v508, %v510
        %v512 = vrot.slane %v505, %v511
        %v514 = vunpack.c.l.s4 1966171168
        %v515 = vunpack.c.0.s8 %v514
        %v516 = vlaneseq
        %v517 = vshrl.u32 %v516, 7
        %v518 = vsub.s32 %v515, %v517
        %v519 = vrot.slane %v512, %v518
        %v521 = vadd.f32 %v454, %v519
        %522 = vst.msk [vmem:[#allocation4] sm:$0x1] %vm381, %v521
        %p523 = scmp.eq.s32.totalorder %s30, 1
        // Predicated region
        $region37: #{tpu_custom_call.1} parent=27 // pred_check
          %p524 = pneg %p523
        $region38: #{tpu_custom_call.1} parent=27 // pred_check_branch
          %526 = sbr.rel (%p524) target = $region40
        $region39: #{tpu_custom_call.1} parent=27 // pred_region
          %v527 = vld [vmem:[#allocation2] sm:$0x1]
          %528 = vst.msk [vmem:[%s252] sm:$0x1] %vm381, %v527
          %v529 = vld [vmem:[#allocation3] sm:$0x1]
          %530 = vst.msk [vmem:[%s258] sm:$0x1] %vm381, %v529
          %v531 = vld [vmem:[#allocation4] sm:$0x1]
          %532 = vst.msk [vmem:[%s264] sm:$0x1] %vm381, %v531
        $region40: #{tpu_custom_call.1} parent=27 // pred_fallthru
          _
        %s533 = sand.u32 %s101, 1
        %s534 = scalar_lea.sflag [#allocation7], %s533
        %s535 = sand.u32 %s101, 1
        %s536 = scalar_lea.vmem [#allocation8], %s535
        %s537 = sand.u32 %s25, 1
        %s538 = scalar_lea.sflag [#allocation10], %s537
        %s539 = sand.u32 %s127, 1
        %s540 = scalar_lea.vmem [#allocation9], %s539
        %s541 = sand.u32 %s25, 1
        %s542 = scalar_lea.sflag [#allocation10], %s541
        %s543 = sand.u32 %s153, 1
        %s544 = scalar_lea.vmem [#allocation11], %s543
        // Predicated region
        $region41: #{tpu_custom_call.1} parent=27 // pred_check
          %p545 = pneg %p111
        $region42: #{tpu_custom_call.1} parent=27 // pred_check_branch
          %547 = sbr.rel (%p545) target = $region44
        $region43: #{tpu_custom_call.1} parent=27 // pred_region
          %s549 = ssub.s32 16, 16
          %550 = vsyncadd %s534, %s549
          %s551 = smul.addr %s29, 16
          %s552 = scalar_lea.hbm %s2, %s551
          %s554 = sshll.u32 %s536, 4
          %s555 = int_to_ptr.vmem [resolvable:$true] %s554
          %557 = dma.vmem_to_hbm [thread:$0]  %s555, 16, %s552, %s534
        $region44: #{tpu_custom_call.1} parent=27 // pred_fallthru
          _
        // Predicated region
        $region45: #{tpu_custom_call.1} parent=27 // pred_check
          %p558 = pneg %p137
        $region46: #{tpu_custom_call.1} parent=27 // pred_check_branch
          %560 = sbr.rel (%p558) target = $region48
        $region47: #{tpu_custom_call.1} parent=27 // pred_region
          %s562 = ssub.s32 16, 16
          %563 = vsyncadd %s538, %s562
          %s564 = smul.addr %s29, 16
          %s565 = scalar_lea.hbm %s3, %s564
          %s567 = sshll.u32 %s540, 4
          %s568 = int_to_ptr.vmem [resolvable:$true] %s567
          %570 = dma.vmem_to_hbm [thread:$0]  %s568, 16, %s565, %s538
        $region48: #{tpu_custom_call.1} parent=27 // pred_fallthru
          _
        // Predicated region
        $region49: #{tpu_custom_call.1} parent=27 // pred_check
          %p571 = pneg %p163
        $region50: #{tpu_custom_call.1} parent=27 // pred_check_branch
          %573 = sbr.rel (%p571) target = $region52
        $region51: #{tpu_custom_call.1} parent=27 // pred_region
          %s575 = ssub.s32 16, 16
          %576 = vsyncadd %s542, %s575
          %s577 = smul.addr %s29, 16
          %s578 = scalar_lea.hbm %s4, %s577
          %s580 = sshll.u32 %s544, 4
          %s581 = int_to_ptr.vmem [resolvable:$true] %s580
          %583 = dma.vmem_to_hbm [thread:$0]  %s581, 16, %s578, %s542
        $region52: #{tpu_custom_call.1} parent=27 // pred_fallthru
          _
      $region28: #{tpu_custom_call.1} parent=5 // pred_fallthru
        _
      %p584 = scmp.le.s32.totalorder 2, %s20
      // Predicated region
      $region53: #{tpu_custom_call.1} parent=5 // pred_check
        %p585 = pneg %p584
      $region54: #{tpu_custom_call.1} parent=5 // pred_check_branch
        %587 = sbr.rel (%p585) target = $region56
      $region55: #{tpu_custom_call.1} parent=5 // pred_region
        %s588 = ssub.s32 %s20, 2
        // Predicated region
        $region57: #{tpu_custom_call.1} parent=55 // pred_check
          %p589 = pneg %p117
        $region58: #{tpu_custom_call.1} parent=55 // pred_check_branch
          %591 = sbr.rel (%p589) target = $region60
        $region59: #{tpu_custom_call.1} parent=55 // pred_region
          %s592 = sand.u32 %s102, 1
          %s593 = scalar_lea.sflag [#allocation7], %s592
          %s594 = sand.u32 %s102, 1
          %s595 = scalar_lea.vmem [#allocation8], %s594
          %596 = dma.done %s593, 16
        $region60: #{tpu_custom_call.1} parent=55 // pred_fallthru
          _
        // Predicated region
        $region61: #{tpu_custom_call.1} parent=55 // pred_check
          %p597 = pneg %p143
        $region62: #{tpu_custom_call.1} parent=55 // pred_check_branch
          %599 = sbr.rel (%p597) target = $region64
        $region63: #{tpu_custom_call.1} parent=55 // pred_region
          %s600 = sand.u32 %s26, 1
          %s601 = scalar_lea.sflag [#allocation10], %s600
          %s602 = sand.u32 %s128, 1
          %s603 = scalar_lea.vmem [#allocation9], %s602
          %604 = dma.done %s601, 16
        $region64: #{tpu_custom_call.1} parent=55 // pred_fallthru
          _
        // Predicated region
        $region65: #{tpu_custom_call.1} parent=55 // pred_check
          %p605 = pneg %p169
        $region66: #{tpu_custom_call.1} parent=55 // pred_check_branch
          %607 = sbr.rel (%p605) target = $region68
        $region67: #{tpu_custom_call.1} parent=55 // pred_region
          %s608 = sand.u32 %s26, 1
          %s609 = scalar_lea.sflag [#allocation10], %s608
          %s610 = sand.u32 %s154, 1
          %s611 = scalar_lea.vmem [#allocation11], %s610
          %612 = dma.done %s609, 16
        $region68: #{tpu_custom_call.1} parent=55 // pred_fallthru
          _
      $region56: #{tpu_custom_call.1} parent=5 // pred_fallthru
        _
    $region6: #{tpu_custom_call.1} parent=1 // loop_footer
      %s24 = sadd.s32 1, %s20
    $region7: #{tpu_custom_call.1} parent=1 // loop_footer_branch
      %19 = sbr.rel target = $region3
    $region8: #{tpu_custom_call.1} parent=1 // loop_exit
      _
    %613 = vsyncpa [#allocation6], 1
    %s614 = scalar_lea.sflag [#allocation6], 1
    %615 = vsyncpa %s614, 1
    %616 = vsyncpa [#allocation7], 1
    %s617 = scalar_lea.sflag [#allocation7], 1
    %618 = vsyncpa %s617, 1
    %619 = vsyncpa [#allocation10], 1
    %s620 = scalar_lea.sflag [#allocation10], 1
    %621 = vsyncpa %s620, 1

</llo_original>
